<compile_context>
chip_gen: v5e
topology: v5e:2x2
jax: 0.10.0
libtpu: 0.0.40
codegen_flags: <defaults>
</compile_context>

<pallas_src>
import math
import functools

import jax
import jax.numpy as jnp
from jax import lax
from jax.experimental import pallas as pl
from jax.experimental.pallas import tpu as pltpu


def mha_kernel(x_ref, wqkv_ref, wp_ref, bias_ref, o_ref, *,
               n_head, head_size, hidden_dim, mxu_dtype):
    # Blocks seen by the kernel:
    #   x_ref    : (1, T, H)        one batch row per grid step
    #   wqkv_ref : (H+1, 3*D)       rows 0..H-1 = [wq*inv_sqrt | wk | wv],
    #                               row H = [bq*inv_sqrt | bk | bv]
    #   wp_ref   : (D+1, H)         rows 0..D-1 = wp, row D = bp
    #   bias_ref : (T, T)           additive causal bias (0 / -1e30)
    #   o_ref    : (1, T, H)
    T = x_ref.shape[1]
    H = hidden_dim
    hs = head_size
    D = n_head * hs

    # ---- fused Q/K/V projection: one lane-dense (T,H) @ (H,3D) matmul ----
    x2 = x_ref[0].astype(mxu_dtype)                         # (T, H)
    w_qkv = wqkv_ref[:H, :].astype(mxu_dtype)               # (H, 3D)
    b_qkv = wqkv_ref[H:H + 1, :]                            # (1, 3D), f32
    qkv = jnp.dot(x2, w_qkv,
                  preferred_element_type=jnp.float32) + b_qkv   # (T, 3D), f32

    bias = bias_ref[...]                                    # (T, T), f32

    # ---- per-head attention core (scores / softmax / context) ----
    # Heads live in 8-lane slices of qkv; the per-head matmul count here is
    # identical to a batched einsum, so a static unrolled loop is fine.
    ctx_heads = []
    for h in range(n_head):
        q_h = qkv[:, h * hs:(h + 1) * hs].astype(mxu_dtype)            # (T, hs)
        k_h = qkv[:, D + h * hs:D + (h + 1) * hs].astype(mxu_dtype)    # (T, hs)
        v_h = qkv[:, 2 * D + h * hs:2 * D + (h + 1) * hs].astype(mxu_dtype)

        # q @ k^T with the transpose folded into the contraction dims.
        # (1/sqrt(head_size) already folded into the query weights/bias.)
        s = lax.dot_general(q_h, k_h, (((1,), (1,)), ((), ())),
                            preferred_element_type=jnp.float32)        # (T, T)
        s = s + bias

        # numerically stable softmax (f32); 1/sum goes to the EUP
        m = jnp.max(s, axis=-1, keepdims=True)
        e = jnp.exp(s - m)
        inv = pl.reciprocal(jnp.sum(e, axis=-1, keepdims=True), approx=True)
        attn = e * inv
        # TODO(synk): attention-weight dropout (train mode) not implemented.

        ctx_heads.append(jnp.dot(attn.astype(mxu_dtype), v_h,
                                 preferred_element_type=jnp.float32))  # (T, hs)

    # lane-concat heads -> (T, D); then ONE (T,D)@(D,H) output projection.
    ctx = jnp.concatenate(ctx_heads, axis=-1)                # (T, D), f32
    w_p = wp_ref[:D, :].astype(mxu_dtype)                    # (D, H)
    b_p = wp_ref[D:D + 1, :]                                 # (1, H), f32
    out = jnp.dot(ctx.astype(mxu_dtype), w_p,
                  preferred_element_type=jnp.float32) + b_p  # (T, H)
    # TODO(synk): output dropout (train mode) not implemented.

    o_ref[0] = out.astype(o_ref.dtype)


def multi_head_attention(x, params, *, n_head, head_size,
                         mxu_dtype=jnp.bfloat16):
    """params = (wq, wk, wv, bq, bk, bv, wp, bp), stored [in, out]:
    wq/wk/wv: (H, n_head*hs), bq/bk/bv: (1, n_head*hs), wp: (D, H), bp: (1, H)."""
    B, T, H = x.shape
    wq, wk, wv, bq, bk, bv, wp, bp = params
    D = n_head * head_size
    inv_sqrt = 1.0 / math.sqrt(head_size)

    # Host-side (plain JAX, free) packing:
    #  * softmax scale folded into the query projection,
    #  * QKV weights + biases in one array, output proj weights + bias in another,
    #  * causal additive bias computed once (hoisted out of the per-step path).
    wqkv = jnp.concatenate([wq * inv_sqrt, wk, wv], axis=1)            # (H, 3D)
    bqkv = jnp.concatenate([bq * inv_sqrt, bk, bv], axis=1)            # (1, 3D)
    wqkv_pack = jnp.concatenate([wqkv, bqkv], axis=0)                  # (H+1, 3D)
    wp_pack = jnp.concatenate([wp, bp], axis=0)                        # (D+1, H)

    row = jnp.arange(T, dtype=jnp.int32)[:, None]
    col = jnp.arange(T, dtype=jnp.int32)[None, :]
    causal_bias = jnp.where(col <= row, 0.0, -1e30).astype(jnp.float32)  # (T, T)

    kernel = functools.partial(mha_kernel, n_head=n_head, head_size=head_size,
                               hidden_dim=H, mxu_dtype=mxu_dtype)

    return pl.pallas_call(
        kernel,
        out_shape=jax.ShapeDtypeStruct((B, T, H), x.dtype),
        grid_spec=pltpu.PrefetchScalarGridSpec(
            num_scalar_prefetch=0,
            # One batch row per step; "parallel" shards rows across the two
            # v7x TensorCores. (On single-TC v5e/v6e the extra step only costs
            # ~0.35us at these sizes.)
            grid=(B,),
            in_specs=[
                pl.BlockSpec((1, T, H), lambda b: (b, 0, 0)),          # x
                pl.BlockSpec((H + 1, 3 * D), lambda b: (0, 0)),        # wqkv+bias
                pl.BlockSpec((D + 1, H), lambda b: (0, 0)),            # wp+bias
                pl.BlockSpec((T, T), lambda b: (0, 0)),                # causal bias
            ],
            out_specs=pl.BlockSpec((1, T, H), lambda b: (b, 0, 0)),
        ),
        compiler_params=pltpu.CompilerParams(
            dimension_semantics=("parallel",)),
    )(x, wqkv_pack, wp_pack, causal_bias)


def reference_mha(x, params, *, n_head, head_size):
    """Plain-JAX f32 reference mirroring the PyTorch module (eval mode)."""
    wq, wk, wv, bq, bk, bv, wp, bp = params
    B, T, H = x.shape
    q = x @ wq + bq[0]
    k = x @ wk + bk[0]
    v = x @ wv + bv[0]
    mask = jnp.tril(jnp.ones((T, T), dtype=bool))
    outs = []
    for h in range(n_head):
        sl = slice(h * head_size, (h + 1) * head_size)
        scores = (q[:, :, sl] @ jnp.swapaxes(k[:, :, sl], -2, -1)) / math.sqrt(head_size)
        scores = jnp.where(mask, scores, -jnp.inf)
        attn = jax.nn.softmax(scores, axis=-1)
        outs.append(attn @ v[:, :, sl])
    concat = jnp.concatenate(outs, axis=-1)
    return concat @ wp + bp[0]


if __name__ == "__main__":
    # config: hidden_dim=32, n_head=4, head_size=8, block_size>=seq_len, dropout (eval)
    B, T, H = 2, 8, 32
    n_head, head_size = 4, 8
    D = n_head * head_size

    key = jax.random.PRNGKey(0)
    keys = jax.random.split(key, 10)
    scale = 0.1
    x = jax.random.normal(keys[0], (B, T, H), dtype=jnp.float32)
    wq = scale * jax.random.normal(keys[1], (H, D), dtype=jnp.float32)
    wk = scale * jax.random.normal(keys[2], (H, D), dtype=jnp.float32)
    wv = scale * jax.random.normal(keys[3], (H, D), dtype=jnp.float32)
    bq = scale * jax.random.normal(keys[4], (1, D), dtype=jnp.float32)
    bk = scale * jax.random.normal(keys[5], (1, D), dtype=jnp.float32)
    bv = scale * jax.random.normal(keys[6], (1, D), dtype=jnp.float32)
    wp = scale * jax.random.normal(keys[7], (H, H), dtype=jnp.float32)
    bp = scale * jax.random.normal(keys[8], (1, H), dtype=jnp.float32)
    params = (wq, wk, wv, bq, bk, bv, wp, bp)

    out = multi_head_attention(x, params, n_head=n_head, head_size=head_size)
    out = jax.block_until_ready(out)

    ref = reference_mha(x, params, n_head=n_head, head_size=head_size)
    assert out.shape == (B, T, H)
    # bf16 MXU operands (f32 accumulation) + approx reciprocal => ~1e-3 abs error
    # vs. the pure-f32 reference; tolerance chosen accordingly.
    assert jnp.allclose(out, ref, atol=2e-2, rtol=2e-2), "mismatch vs reference"

    print("KERNEL_OK")
</pallas_src>

<mosaic_0001>
module attributes {stable_mosaic.version = 11 : i64} {
  func.func @mha_kernel(%arg0: i32, %arg1: memref<1x8x32xf32, #tpu.memory_space<vmem>>, %arg2: memref<33x96xf32, #tpu.memory_space<vmem>>, %arg3: memref<33x32xf32, #tpu.memory_space<vmem>>, %arg4: memref<8x8xf32, #tpu.memory_space<vmem>>, %arg5: memref<1x8x32xf32, #tpu.memory_space<vmem>>) attributes {dimension_semantics = [#tpu.dimension_semantics<parallel>], iteration_bounds = array<i64: 2>, scalar_prefetch = 0 : i64, scratch_operands = 0 : i64, tpu.core_type = #tpu.core_type<tc>, window_params = [{transform_indices = @transform_0, window_bounds = array<i64: 1, 8, 32>}, {pipeline_mode = #tpu.pipeline_mode<synchronous>, transform_indices = @transform_1, window_bounds = array<i64: 33, 96>}, {pipeline_mode = #tpu.pipeline_mode<synchronous>, transform_indices = @transform_2, window_bounds = array<i64: 33, 32>}, {pipeline_mode = #tpu.pipeline_mode<synchronous>, transform_indices = @transform_3, window_bounds = array<i64: 8, 8>}, {transform_indices = @transform_4, window_bounds = array<i64: 1, 8, 32>}]} {
    %c0 = arith.constant 0 : index
    %c0_0 = arith.constant 0 : index
    %c0_1 = arith.constant 0 : index
    %0 = vector.load %arg1[%c0, %c0_0, %c0_1] : memref<1x8x32xf32, #tpu.memory_space<vmem>>, vector<1x8x32xf32>
    %1 = vector.shape_cast %0 : vector<1x8x32xf32> to vector<8x32xf32>
    %2 = arith.truncf %1 : vector<8x32xf32> to vector<8x32xbf16>
    %c0_2 = arith.constant 0 : index
    %c0_3 = arith.constant 0 : index
    %3 = vector.load %arg2[%c0_2, %c0_3] : memref<33x96xf32, #tpu.memory_space<vmem>>, vector<32x96xf32>
    %4 = arith.truncf %3 : vector<32x96xf32> to vector<32x96xbf16>
    %c32 = arith.constant 32 : index
    %c0_4 = arith.constant 0 : index
    %5 = vector.load %arg2[%c32, %c0_4] : memref<33x96xf32, #tpu.memory_space<vmem>>, vector<1x96xf32>
    %cst = arith.constant dense<0.000000e+00> : vector<8x96xf32>
    %6 = tpu.matmul %2, %4, %cst {dimension_numbers = #tpu.dot_dimension_numbers<[1], [0], [0], [1], [0, 0, 1, 1], [], []>} : vector<8x32xbf16>, vector<32x96xbf16>, vector<8x96xf32> -> vector<8x96xf32>
    %7 = vector.broadcast %5 : vector<1x96xf32> to vector<8x96xf32>
    %8 = arith.addf %6, %7 : vector<8x96xf32>
    %c0_5 = arith.constant 0 : index
    %c0_6 = arith.constant 0 : index
    %9 = vector.load %arg4[%c0_5, %c0_6] : memref<8x8xf32, #tpu.memory_space<vmem>>, vector<8x8xf32>
    %10 = vector.extract_strided_slice %8 {offsets = [0, 0], sizes = [8, 8], strides = [1, 1]} : vector<8x96xf32> to vector<8x8xf32>
    %11 = arith.truncf %10 : vector<8x8xf32> to vector<8x8xbf16>
    %12 = vector.extract_strided_slice %8 {offsets = [0, 32], sizes = [8, 8], strides = [1, 1]} : vector<8x96xf32> to vector<8x8xf32>
    %13 = arith.truncf %12 : vector<8x8xf32> to vector<8x8xbf16>
    %14 = vector.extract_strided_slice %8 {offsets = [0, 64], sizes = [8, 8], strides = [1, 1]} : vector<8x96xf32> to vector<8x8xf32>
    %15 = arith.truncf %14 : vector<8x8xf32> to vector<8x8xbf16>
    %cst_7 = arith.constant dense<0.000000e+00> : vector<8x8xf32>
    %16 = tpu.matmul %11, %13, %cst_7 {dimension_numbers = #tpu.dot_dimension_numbers<[1], [1], [0], [0], [0, 0, 1, 0], [], []>} : vector<8x8xbf16>, vector<8x8xbf16>, vector<8x8xf32> -> vector<8x8xf32>
    %17 = arith.addf %16, %9 : vector<8x8xf32>
    %cst_8 = arith.constant dense<0xFF800000> : vector<8xf32>
    %18 = vector.multi_reduction <maximumf>, %17, %cst_8 [1] : vector<8x8xf32> to vector<8xf32>
    %19 = vector.shape_cast %18 : vector<8xf32> to vector<8x1xf32>
    %20 = vector.broadcast %19 : vector<8x1xf32> to vector<8x8xf32>
    %21 = arith.subf %17, %20 : vector<8x8xf32>
    %22 = math.exp %21 : vector<8x8xf32>
    %cst_9 = arith.constant dense<0.000000e+00> : vector<8xf32>
    %23 = vector.multi_reduction <add>, %22, %cst_9 [1] : vector<8x8xf32> to vector<8xf32>
    %24 = vector.shape_cast %23 : vector<8xf32> to vector<8x1xf32>
    %25 = tpu.reciprocal %24 {approx = true} : vector<8x1xf32> -> vector<8x1xf32>
    %26 = vector.broadcast %25 : vector<8x1xf32> to vector<8x8xf32>
    %27 = arith.mulf %22, %26 : vector<8x8xf32>
    %28 = arith.truncf %27 : vector<8x8xf32> to vector<8x8xbf16>
    %cst_10 = arith.constant dense<0.000000e+00> : vector<8x8xf32>
    %29 = tpu.matmul %28, %15, %cst_10 {dimension_numbers = #tpu.dot_dimension_numbers<[1], [0], [0], [1], [0, 0, 1, 1], [], []>} : vector<8x8xbf16>, vector<8x8xbf16>, vector<8x8xf32> -> vector<8x8xf32>
    %30 = vector.extract_strided_slice %8 {offsets = [0, 8], sizes = [8, 8], strides = [1, 1]} : vector<8x96xf32> to vector<8x8xf32>
    %31 = arith.truncf %30 : vector<8x8xf32> to vector<8x8xbf16>
    %32 = vector.extract_strided_slice %8 {offsets = [0, 40], sizes = [8, 8], strides = [1, 1]} : vector<8x96xf32> to vector<8x8xf32>
    %33 = arith.truncf %32 : vector<8x8xf32> to vector<8x8xbf16>
    %34 = vector.extract_strided_slice %8 {offsets = [0, 72], sizes = [8, 8], strides = [1, 1]} : vector<8x96xf32> to vector<8x8xf32>
    %35 = arith.truncf %34 : vector<8x8xf32> to vector<8x8xbf16>
    %cst_11 = arith.constant dense<0.000000e+00> : vector<8x8xf32>
    %36 = tpu.matmul %31, %33, %cst_11 {dimension_numbers = #tpu.dot_dimension_numbers<[1], [1], [0], [0], [0, 0, 1, 0], [], []>} : vector<8x8xbf16>, vector<8x8xbf16>, vector<8x8xf32> -> vector<8x8xf32>
    %37 = arith.addf %36, %9 : vector<8x8xf32>
    %cst_12 = arith.constant dense<0xFF800000> : vector<8xf32>
    %38 = vector.multi_reduction <maximumf>, %37, %cst_12 [1] : vector<8x8xf32> to vector<8xf32>
    %39 = vector.shape_cast %38 : vector<8xf32> to vector<8x1xf32>
    %40 = vector.broadcast %39 : vector<8x1xf32> to vector<8x8xf32>
    %41 = arith.subf %37, %40 : vector<8x8xf32>
    %42 = math.exp %41 : vector<8x8xf32>
    %cst_13 = arith.constant dense<0.000000e+00> : vector<8xf32>
    %43 = vector.multi_reduction <add>, %42, %cst_13 [1] : vector<8x8xf32> to vector<8xf32>
    %44 = vector.shape_cast %43 : vector<8xf32> to vector<8x1xf32>
    %45 = tpu.reciprocal %44 {approx = true} : vector<8x1xf32> -> vector<8x1xf32>
    %46 = vector.broadcast %45 : vector<8x1xf32> to vector<8x8xf32>
    %47 = arith.mulf %42, %46 : vector<8x8xf32>
    %48 = arith.truncf %47 : vector<8x8xf32> to vector<8x8xbf16>
    %cst_14 = arith.constant dense<0.000000e+00> : vector<8x8xf32>
    %49 = tpu.matmul %48, %35, %cst_14 {dimension_numbers = #tpu.dot_dimension_numbers<[1], [0], [0], [1], [0, 0, 1, 1], [], []>} : vector<8x8xbf16>, vector<8x8xbf16>, vector<8x8xf32> -> vector<8x8xf32>
    %50 = vector.extract_strided_slice %8 {offsets = [0, 16], sizes = [8, 8], strides = [1, 1]} : vector<8x96xf32> to vector<8x8xf32>
    %51 = arith.truncf %50 : vector<8x8xf32> to vector<8x8xbf16>
    %52 = vector.extract_strided_slice %8 {offsets = [0, 48], sizes = [8, 8], strides = [1, 1]} : vector<8x96xf32> to vector<8x8xf32>
    %53 = arith.truncf %52 : vector<8x8xf32> to vector<8x8xbf16>
    %54 = vector.extract_strided_slice %8 {offsets = [0, 80], sizes = [8, 8], strides = [1, 1]} : vector<8x96xf32> to vector<8x8xf32>
    %55 = arith.truncf %54 : vector<8x8xf32> to vector<8x8xbf16>
    %cst_15 = arith.constant dense<0.000000e+00> : vector<8x8xf32>
    %56 = tpu.matmul %51, %53, %cst_15 {dimension_numbers = #tpu.dot_dimension_numbers<[1], [1], [0], [0], [0, 0, 1, 0], [], []>} : vector<8x8xbf16>, vector<8x8xbf16>, vector<8x8xf32> -> vector<8x8xf32>
    %57 = arith.addf %56, %9 : vector<8x8xf32>
    %cst_16 = arith.constant dense<0xFF800000> : vector<8xf32>
    %58 = vector.multi_reduction <maximumf>, %57, %cst_16 [1] : vector<8x8xf32> to vector<8xf32>
    %59 = vector.shape_cast %58 : vector<8xf32> to vector<8x1xf32>
    %60 = vector.broadcast %59 : vector<8x1xf32> to vector<8x8xf32>
    %61 = arith.subf %57, %60 : vector<8x8xf32>
    %62 = math.exp %61 : vector<8x8xf32>
    %cst_17 = arith.constant dense<0.000000e+00> : vector<8xf32>
    %63 = vector.multi_reduction <add>, %62, %cst_17 [1] : vector<8x8xf32> to vector<8xf32>
    %64 = vector.shape_cast %63 : vector<8xf32> to vector<8x1xf32>
    %65 = tpu.reciprocal %64 {approx = true} : vector<8x1xf32> -> vector<8x1xf32>
    %66 = vector.broadcast %65 : vector<8x1xf32> to vector<8x8xf32>
    %67 = arith.mulf %62, %66 : vector<8x8xf32>
    %68 = arith.truncf %67 : vector<8x8xf32> to vector<8x8xbf16>
    %cst_18 = arith.constant dense<0.000000e+00> : vector<8x8xf32>
    %69 = tpu.matmul %68, %55, %cst_18 {dimension_numbers = #tpu.dot_dimension_numbers<[1], [0], [0], [1], [0, 0, 1, 1], [], []>} : vector<8x8xbf16>, vector<8x8xbf16>, vector<8x8xf32> -> vector<8x8xf32>
    %70 = vector.extract_strided_slice %8 {offsets = [0, 24], sizes = [8, 8], strides = [1, 1]} : vector<8x96xf32> to vector<8x8xf32>
    %71 = arith.truncf %70 : vector<8x8xf32> to vector<8x8xbf16>
    %72 = vector.extract_strided_slice %8 {offsets = [0, 56], sizes = [8, 8], strides = [1, 1]} : vector<8x96xf32> to vector<8x8xf32>
    %73 = arith.truncf %72 : vector<8x8xf32> to vector<8x8xbf16>
    %74 = vector.extract_strided_slice %8 {offsets = [0, 88], sizes = [8, 8], strides = [1, 1]} : vector<8x96xf32> to vector<8x8xf32>
    %75 = arith.truncf %74 : vector<8x8xf32> to vector<8x8xbf16>
    %cst_19 = arith.constant dense<0.000000e+00> : vector<8x8xf32>
    %76 = tpu.matmul %71, %73, %cst_19 {dimension_numbers = #tpu.dot_dimension_numbers<[1], [1], [0], [0], [0, 0, 1, 0], [], []>} : vector<8x8xbf16>, vector<8x8xbf16>, vector<8x8xf32> -> vector<8x8xf32>
    %77 = arith.addf %76, %9 : vector<8x8xf32>
    %cst_20 = arith.constant dense<0xFF800000> : vector<8xf32>
    %78 = vector.multi_reduction <maximumf>, %77, %cst_20 [1] : vector<8x8xf32> to vector<8xf32>
    %79 = vector.shape_cast %78 : vector<8xf32> to vector<8x1xf32>
    %80 = vector.broadcast %79 : vector<8x1xf32> to vector<8x8xf32>
    %81 = arith.subf %77, %80 : vector<8x8xf32>
    %82 = math.exp %81 : vector<8x8xf32>
    %cst_21 = arith.constant dense<0.000000e+00> : vector<8xf32>
    %83 = vector.multi_reduction <add>, %82, %cst_21 [1] : vector<8x8xf32> to vector<8xf32>
    %84 = vector.shape_cast %83 : vector<8xf32> to vector<8x1xf32>
    %85 = tpu.reciprocal %84 {approx = true} : vector<8x1xf32> -> vector<8x1xf32>
    %86 = vector.broadcast %85 : vector<8x1xf32> to vector<8x8xf32>
    %87 = arith.mulf %82, %86 : vector<8x8xf32>
    %88 = arith.truncf %87 : vector<8x8xf32> to vector<8x8xbf16>
    %cst_22 = arith.constant dense<0.000000e+00> : vector<8x8xf32>
    %89 = tpu.matmul %88, %75, %cst_22 {dimension_numbers = #tpu.dot_dimension_numbers<[1], [0], [0], [1], [0, 0, 1, 1], [], []>} : vector<8x8xbf16>, vector<8x8xbf16>, vector<8x8xf32> -> vector<8x8xf32>
    %90 = tpu.concatenate %29, %49, %69, %89 in 1 : vector<8x8xf32>, vector<8x8xf32>, vector<8x8xf32>, vector<8x8xf32> -> vector<8x32xf32>
    %c0_23 = arith.constant 0 : index
    %c0_24 = arith.constant 0 : index
    %91 = vector.load %arg3[%c0_23, %c0_24] : memref<33x32xf32, #tpu.memory_space<vmem>>, vector<32x32xf32>
    %92 = arith.truncf %91 : vector<32x32xf32> to vector<32x32xbf16>
    %c32_25 = arith.constant 32 : index
    %c0_26 = arith.constant 0 : index
    %93 = vector.load %arg3[%c32_25, %c0_26] : memref<33x32xf32, #tpu.memory_space<vmem>>, vector<1x32xf32>
    %94 = arith.truncf %90 : vector<8x32xf32> to vector<8x32xbf16>
    %cst_27 = arith.constant dense<0.000000e+00> : vector<8x32xf32>
    %95 = tpu.matmul %94, %92, %cst_27 {dimension_numbers = #tpu.dot_dimension_numbers<[1], [0], [0], [1], [0, 0, 1, 1], [], []>} : vector<8x32xbf16>, vector<32x32xbf16>, vector<8x32xf32> -> vector<8x32xf32>
    %96 = vector.broadcast %93 : vector<1x32xf32> to vector<8x32xf32>
    %97 = arith.addf %95, %96 : vector<8x32xf32>
    %c0_28 = arith.constant 0 : index
    %c0_29 = arith.constant 0 : index
    %c0_30 = arith.constant 0 : index
    %98 = vector.load %arg5[%c0_28, %c0_29, %c0_30] : memref<1x8x32xf32, #tpu.memory_space<vmem>>, vector<1x8x32xf32>
    %99 = vector.shape_cast %98 : vector<1x8x32xf32> to vector<8x32xf32>
    %100 = vector.shape_cast %97 : vector<8x32xf32> to vector<1x8x32xf32>
    tpu.vector_store %arg5[%c0_28, %c0_29, %c0_30], %100 {strides = array<i32>} : memref<1x8x32xf32, #tpu.memory_space<vmem>>, vector<1x8x32xf32>,
    return
  }
  func.func @transform_0(%arg0: i32) -> (i32, i32, i32) {
    %c0_i32 = arith.constant 0 : i32
    %c0_i32_0 = arith.constant 0 : i32
    %c0_i32_1 = arith.constant 0 : i32
    return %arg0, %c0_i32, %c0_i32_0 : i32, i32, i32
  }
  func.func @transform_1(%arg0: i32) -> (i32, i32) {
    %c0_i32 = arith.constant 0 : i32
    %c0_i32_0 = arith.constant 0 : i32
    %c0_i32_1 = arith.constant 0 : i32
    return %c0_i32, %c0_i32_0 : i32, i32
  }
  func.func @transform_2(%arg0: i32) -> (i32, i32) {
    %c0_i32 = arith.constant 0 : i32
    %c0_i32_0 = arith.constant 0 : i32
    %c0_i32_1 = arith.constant 0 : i32
    return %c0_i32, %c0_i32_0 : i32, i32
  }
  func.func @transform_3(%arg0: i32) -> (i32, i32) {
    %c0_i32 = arith.constant 0 : i32
    %c0_i32_0 = arith.constant 0 : i32
    %c0_i32_1 = arith.constant 0 : i32
    return %c0_i32, %c0_i32_0 : i32, i32
  }
  func.func @transform_4(%arg0: i32) -> (i32, i32, i32) {
    %c0_i32 = arith.constant 0 : i32
    %c0_i32_0 = arith.constant 0 : i32
    %c0_i32_1 = arith.constant 0 : i32
    return %arg0, %c0_i32, %c0_i32_0 : i32, i32, i32
  }
}

</mosaic_0001>

<llo_original>
// kernel: tpu_custom_call.1
$region0: #{tpu_custom_call.1}
  #allocation0 [shape = 'u32[]', space=smem, size = 0x4, offset = 0x4, fixed_abs, tag = 'smem constant byte address 0x4 - core index']
  #allocation1 [shape = 'u32[72,128]{1,0:T(1,128)}', space=vmem, size = 0x9000, scoped, tag = 'internal scratch']
  %s0 = inlined_call_operand.vmem [shape: f32[2,8,32], index: 0, kind: input, shape index: {}]
  %s1 = inlined_call_operand.vmem [shape: f32[33,96], index: 1, kind: input, shape index: {}]
  %s2 = inlined_call_operand.vmem [shape: f32[33,32], index: 2, kind: input, shape index: {}]
  %s3 = inlined_call_operand.vmem [shape: f32[8,8], index: 3, kind: input, shape index: {}]
  %s4 = inlined_call_operand.hbm [shape: f32[2,8,32], index: 4, kind: output, shape index: {}]
  %s5 = sld [smem:[#allocation0]]
  $region49: #{tpu_custom_call.1} parent=0
    _
  %s7 = ssub.s32 1, %s5
  %s8 = scalar_select 0, %s7, %s5
  $region1: #{tpu_custom_call.1} parent=0
    #allocation2 [shape = 'u8[8192]{0}', space=vmem, size = 0x2000, scoped, tag = 'output window, operand 0']
    #allocation3 [shape = 's32[2]{0}', space=sflag, size = 0x8, scoped, tag = 'scoped memory for tpu_custom_call.1']
    %9 = vsyncpa [#allocation3], 0
    %s10 = scalar_lea.sflag [#allocation3], 1
    %11 = vsyncpa %s10, 0
    loop: start=0, step=1, limit=4
    $region2: #{tpu_custom_call.1} parent=1 // loop_pre_header
      _
    $region3: #{tpu_custom_call.1} parent=1 // loop_header
      %s13 = sphi 0, %s17
      %p14 = scmp.ge.s32.totalorder %s13, 4
      %s23 = sphi 0, %s25
      %s26 = sphi 0, %s23
      %s27 = sphi 0, %s26
      %s43 = sphi 0, %s27
      %s47 = sphi 0, %s47
      %s49 = sphi 0, %s47
      %s50 = sphi 0, %s49
      %s64 = sphi 0, %s50
      %s68 = sphi 0, %s68
      %s70 = sphi 0, %s68
      %s71 = sphi 0, %s70
      %s85 = sphi 0, %s71
      %s89 = sphi 0, %s89
      %s91 = sphi 0, %s89
      %s92 = sphi 0, %s91
      %s106 = sphi 0, %s92
      %s112 = sphi 0, %s114
      %s115 = sphi 0, %s112
      %s116 = sphi 0, %s115
      %s132 = sphi 0, %s116
    $region4: #{tpu_custom_call.1} parent=1 // loop_header_branch
      %16 = sbr.rel (%p14) target = $region8
    $region5: #{tpu_custom_call.1} parent=1 // loop_body
      %s18 = ssub.s32 %s13, 1
      %s19 = ssub.s32 %s13, 2
      %s20 = sadd.s32 %s13, 1
      %s21 = ssub.s32 %s13, %s20
      %p22 = scmp.eq.s32.totalorder %s21, 0
      %s24 = sadd.s32 %s23, 1
      %s25 = scalar_select %p22, %s23, %s24
      %p28 = pneg %p22
      %p29 = scmp.eq.s32.totalorder %s13, 1
      %p30 = por %p28, %p29
      %p31 = scmp.ne.s32.totalorder %s23, %s26
      %p32 = scmp.eq.s32.totalorder %s13, 0
      %p33 = por %p31, %p32
      %p34 = scmp.ne.s32.totalorder %s23, %s26
      %p35 = scmp.eq.s32.totalorder %s18, 1
      %p36 = por %p34, %p35
      %p37 = scmp.ne.s32.totalorder %s26, %s27
      %p38 = scmp.eq.s32.totalorder %s18, 0
      %p39 = por %p37, %p38
      %p40 = scmp.ne.s32.totalorder %s26, %s27
      %p41 = scmp.eq.s32.totalorder %s19, 1
      %p42 = por %p40, %p41
      %p44 = scmp.ne.s32.totalorder %s27, %s43
      %p45 = scmp.eq.s32.totalorder %s19, 0
      %p46 = por %p44, %p45
      %s48 = sadd.s32 %s47, 1
      %p51 = scmp.eq.s32.totalorder %s13, 1
      %p52 = scmp.ne.s32.totalorder %s47, %s49
      %p53 = scmp.eq.s32.totalorder %s13, 0
      %p54 = por %p52, %p53
      %p55 = scmp.ne.s32.totalorder %s47, %s49
      %p56 = scmp.eq.s32.totalorder %s18, 1
      %p57 = por %p55, %p56
      %p58 = scmp.ne.s32.totalorder %s49, %s50
      %p59 = scmp.eq.s32.totalorder %s18, 0
      %p60 = por %p58, %p59
      %p61 = scmp.ne.s32.totalorder %s49, %s50
      %p62 = scmp.eq.s32.totalorder %s19, 1
      %p63 = por %p61, %p62
      %p65 = scmp.ne.s32.totalorder %s50, %s64
      %p66 = scmp.eq.s32.totalorder %s19, 0
      %p67 = por %p65, %p66
      %s69 = sadd.s32 %s68, 1
      %p72 = scmp.eq.s32.totalorder %s13, 1
      %p73 = scmp.ne.s32.totalorder %s68, %s70
      %p74 = scmp.eq.s32.totalorder %s13, 0
      %p75 = por %p73, %p74
      %p76 = scmp.ne.s32.totalorder %s68, %s70
      %p77 = scmp.eq.s32.totalorder %s18, 1
      %p78 = por %p76, %p77
      %p79 = scmp.ne.s32.totalorder %s70, %s71
      %p80 = scmp.eq.s32.totalorder %s18, 0
      %p81 = por %p79, %p80
      %p82 = scmp.ne.s32.totalorder %s70, %s71
      %p83 = scmp.eq.s32.totalorder %s19, 1
      %p84 = por %p82, %p83
      %p86 = scmp.ne.s32.totalorder %s71, %s85
      %p87 = scmp.eq.s32.totalorder %s19, 0
      %p88 = por %p86, %p87
      %s90 = sadd.s32 %s89, 1
      %p93 = scmp.eq.s32.totalorder %s13, 1
      %p94 = scmp.ne.s32.totalorder %s89, %s91
      %p95 = scmp.eq.s32.totalorder %s13, 0
      %p96 = por %p94, %p95
      %p97 = scmp.ne.s32.totalorder %s89, %s91
      %p98 = scmp.eq.s32.totalorder %s18, 1
      %p99 = por %p97, %p98
      %p100 = scmp.ne.s32.totalorder %s91, %s92
      %p101 = scmp.eq.s32.totalorder %s18, 0
      %p102 = por %p100, %p101
      %p103 = scmp.ne.s32.totalorder %s91, %s92
      %p104 = scmp.eq.s32.totalorder %s19, 1
      %p105 = por %p103, %p104
      %p107 = scmp.ne.s32.totalorder %s92, %s106
      %p108 = scmp.eq.s32.totalorder %s19, 0
      %p109 = por %p107, %p108
      %s110 = ssub.s32 %s13, %s20
      %p111 = scmp.eq.s32.totalorder %s110, 0
      %s113 = sadd.s32 %s112, 1
      %s114 = scalar_select %p111, %s112, %s113
      %p117 = pneg %p111
      %p118 = scmp.eq.s32.totalorder %s13, 1
      %p119 = por %p117, %p118
      %p120 = scmp.ne.s32.totalorder %s112, %s115
      %p121 = scmp.eq.s32.totalorder %s13, 0
      %p122 = por %p120, %p121
      %p123 = scmp.ne.s32.totalorder %s112, %s115
      %p124 = scmp.eq.s32.totalorder %s18, 1
      %p125 = por %p123, %p124
      %p126 = scmp.ne.s32.totalorder %s115, %s116
      %p127 = scmp.eq.s32.totalorder %s18, 0
      %p128 = por %p126, %p127
      %p129 = scmp.ne.s32.totalorder %s115, %s116
      %p130 = scmp.eq.s32.totalorder %s19, 1
      %p131 = por %p129, %p130
      %p133 = scmp.ne.s32.totalorder %s116, %s132
      %p134 = scmp.eq.s32.totalorder %s19, 0
      %p135 = por %p133, %p134
      %p136 = scmp.le.s32.totalorder 1, %s13
      %p137 = scmp.lt.s32.totalorder %s13, 3
      %p138 = pnand %p136, %p137
      %p139 = pneg %p138
      // Predicated region
      $region9: #{tpu_custom_call.1} parent=5 // pred_check
        _
      $region10: #{tpu_custom_call.1} parent=5 // pred_check_branch
        %141 = sbr.rel (%p138) target = $region12
      $region11: #{tpu_custom_call.1} parent=5 // pred_region
        %s142 = ssub.s32 %s13, 1
        // Predicated region
        $region13: #{tpu_custom_call.1} parent=11 // pred_check
          %p143 = pneg %p60
        $region14: #{tpu_custom_call.1} parent=11 // pred_check_branch
          %145 = sbr.rel (%p143) target = $region16
        $region15: #{tpu_custom_call.1} parent=11 // pred_region
          _
        $region16: #{tpu_custom_call.1} parent=11 // pred_fallthru
          _
        // Predicated region
        $region17: #{tpu_custom_call.1} parent=11 // pred_check
          %p146 = pneg %p81
        $region18: #{tpu_custom_call.1} parent=11 // pred_check_branch
          %148 = sbr.rel (%p146) target = $region20
        $region19: #{tpu_custom_call.1} parent=11 // pred_region
          _
        $region20: #{tpu_custom_call.1} parent=11 // pred_fallthru
          _
        // Predicated region
        $region21: #{tpu_custom_call.1} parent=11 // pred_check
          %p149 = pneg %p102
        $region22: #{tpu_custom_call.1} parent=11 // pred_check_branch
          %151 = sbr.rel (%p149) target = $region24
        $region23: #{tpu_custom_call.1} parent=11 // pred_region
          _
        $region24: #{tpu_custom_call.1} parent=11 // pred_fallthru
          _
      $region12: #{tpu_custom_call.1} parent=5 // pred_fallthru
        _
      %p152 = scmp.lt.s32.totalorder %s13, 2
      // Predicated region
      $region25: #{tpu_custom_call.1} parent=5 // pred_check
        %p153 = pneg %p152
      $region26: #{tpu_custom_call.1} parent=5 // pred_check_branch
        %155 = sbr.rel (%p153) target = $region28
      $region27: #{tpu_custom_call.1} parent=5 // pred_region
        // Predicated region
        $region29: #{tpu_custom_call.1} parent=27 // pred_check
          %p156 = pneg %p33
        $region30: #{tpu_custom_call.1} parent=27 // pred_check_branch
          %158 = sbr.rel (%p156) target = $region32
        $region31: #{tpu_custom_call.1} parent=27 // pred_region
          %p159 = scmp.lt.s32.totalorder %s13, 1
          %s160 = scalar_select %p159, %s13, 1
          %s161 = smul.addr %s160, 8
          %s162 = scalar_lea.vmem %s0, %s161
        $region32: #{tpu_custom_call.1} parent=27 // pred_fallthru
          _
      $region28: #{tpu_custom_call.1} parent=5 // pred_fallthru
        _
      %p163 = scmp.le.s32.totalorder 1, %s13
      %p164 = scmp.lt.s32.totalorder %s13, 3
      %p165 = pnand %p163, %p164
      %p166 = pneg %p165
      // Predicated region
      $region33: #{tpu_custom_call.1} parent=5 // pred_check
        _
      $region34: #{tpu_custom_call.1} parent=5 // pred_check_branch
        %168 = sbr.rel (%p165) target = $region36
      $region35: #{tpu_custom_call.1} parent=5 // pred_region
        %s169 = ssub.s32 %s13, 1
        %p170 = scmp.lt.s32.totalorder %s18, 1
        %s171 = scalar_select %p170, %s18, 1
        %s172 = smul.addr %s171, 8
        %s173 = scalar_lea.vmem %s0, %s172
        %p174 = pneg %p39
        %p175 = pneg %p36
        %p176 = pneg %p60
        %p177 = pneg %p57
        %p178 = pneg %p81
        %p179 = pneg %p78
        %p180 = pneg %p102
        %p181 = pneg %p99
        %p182 = pneg %p128
        %p183 = pneg %p125
        %s184 = sand.u32 %s115, 1
        %s185 = scalar_lea.sflag [#allocation3], %s184
        %s186 = sand.u32 %s115, 1
        %s187 = smul.addr %s186, 8
        %s188 = scalar_lea.vmem [#allocation2], %s187
        %p189 = scmp.lt.s32.totalorder %s18, 1
        %s190 = scalar_select %p189, %s18, 1
        %s191 = smul.addr %s190, 8
        %s192 = scalar_lea.vmem %s0, %s191
        %v194 = vld [vmem:[%s192] sm:$0xff]
        %v195 = vpack.c.bf16 %v194, %v194
        %v196 = vld [vmem:[%s1] sm:$0xff]
        %v197 = vld [vmem:[%s1 + $0x8] sm:$0xff]
        %v198 = vld [vmem:[%s1 + $0x10] sm:$0xff]
        %v199 = vld [vmem:[%s1 + $0x18] sm:$0xff]
        %v200 = vpack.c.bf16 %v197, %v196
        %v201 = vpack.c.bf16 %v199, %v198
        %v202 = vld [vmem:[%s1 + $0x20] sm:$0x1]
        %v203 = vperm.slane %v202, 0
        %vm204 = vcmask 261120
        %v206 = vsel %vm204, %v195, 0
        %208 = vmatpush.bf16.msra.mxu0 0
        %209 = vmatpush.bf16.msra.mxu0 0
        %210 = vmatpush.bf16.msra.mxu0 0
        %211 = vmatpush.bf16.msra.mxu0 0
        %212 = vmatpush.bf16.msra.mxu0 0
        %213 = vmatpush.bf16.msra.mxu0 0
        %214 = vmatpush.bf16.msra.mxu0 %v201
        %215 = vmatpush.bf16.msra.mxu0 %v200
        %216 = vmatmul.bf16.gmra.mxu0 %v206
        %v217 = vpop.f32.mrf.mxu0
        %v218 = vadd.f32 %v203, %v217
        %v219 = vpop.f32.mrf.mxu0
        %220 = vdwg.mxu0
        %v221 = vld [vmem:[%s3] sm:$0xff]
        %v222 = vpack.c.bf16 %v218, %v218
        %224 = vrot.lane.b32.xlu0 %v222, 96
        %v225 = vpop.permute.xlu0 %224
        %vm226 = vcmask 64512
        %v228 = vsel %vm226, %v222, 0
        %v231 = vsel %vm226, %v225, 0
        %233 = vmatpush.bf16.xpose.msra.mxu0 0
        %234 = vmatpush.bf16.xpose.msra.mxu0 0
        %235 = vmatpush.bf16.xpose.msra.mxu0 0
        %236 = vmatpush.bf16.xpose.msra.mxu0 0
        %237 = vmatpush.bf16.xpose.msra.mxu0 0
        %238 = vmatpush.bf16.xpose.msra.mxu0 0
        %239 = vmatpush.bf16.xpose.msra.mxu0 0
        %240 = vmatpush.bf16.xpose.msra.mxu0 %v231
        %241 = vmatmul.bf16.gmra.mxu0 %v228
        %v242 = vpop.f32.mrf.mxu0
        %v243 = vadd.f32 %v221, %v242
        %v244 = vpop.f32.mrf.mxu0
        %245 = vdwg.mxu0
        %v246 = vsel %vm226, %v243, -inf
        %247 = vmax.xlane.f32.xlu0 %v246
        %v248 = vpop.xlane.xlu0 %247
        %v249 = vsub.f32 %v243, %v248
        %v250 = vmul.f32 %v249, 1.442695
        %v251 = vpow.pop %v250
        %v252 = vsel %vm226, %v251, 0.0
        %253 = vadd.xlane.f32.xlu0 %v252
        %v254 = vpop.xlane.xlu0 %253
        %v255 = vrcp.pop %v254
        %v256 = vmul.f32 %v251, %v255
        %v257 = vpack.c.bf16 %v256, %v256
        %258 = vrot.lane.b32.xlu0 %v222, 64
        %v259 = vpop.permute.xlu0 %258
        %v261 = vsel %vm226, %v257, 0
        %vm263 = vcmask 1043456
        %v265 = vsel %vm263, %v259, 0
        %267 = vmatpush.bf16.msra.mxu0 0
        %268 = vmatpush.bf16.msra.mxu0 0
        %269 = vmatpush.bf16.msra.mxu0 0
        %270 = vmatpush.bf16.msra.mxu0 0
        %271 = vmatpush.bf16.msra.mxu0 0
        %272 = vmatpush.bf16.msra.mxu0 0
        %273 = vmatpush.bf16.msra.mxu0 0
        %274 = vmatpush.bf16.msra.mxu0 %v265
        %275 = vmatmul.bf16.gmra.mxu0 %v261
        %v276 = vpop.f32.mrf.mxu0
        %v277 = vadd.f32 0.0, %v276
        %v278 = vpop.f32.mrf.mxu0
        %279 = vdwg.mxu0
        %280 = vrot.lane.b32.xlu0 %v222, 120
        %v281 = vpop.permute.xlu0 %280
        %282 = vrot.lane.b32.xlu0 %v222, 88
        %v283 = vpop.permute.xlu0 %282
        %v285 = vsel %vm226, %v281, 0
        %v288 = vsel %vm226, %v283, 0
        %290 = vmatpush.bf16.xpose.msra.mxu0 0
        %291 = vmatpush.bf16.xpose.msra.mxu0 0
        %292 = vmatpush.bf16.xpose.msra.mxu0 0
        %293 = vmatpush.bf16.xpose.msra.mxu0 0
        %294 = vmatpush.bf16.xpose.msra.mxu0 0
        %295 = vmatpush.bf16.xpose.msra.mxu0 0
        %296 = vmatpush.bf16.xpose.msra.mxu0 0
        %297 = vmatpush.bf16.xpose.msra.mxu0 %v288
        %298 = vmatmul.bf16.gmra.mxu0 %v285
        %v299 = vpop.f32.mrf.mxu0
        %v300 = vadd.f32 %v221, %v299
        %v301 = vpop.f32.mrf.mxu0
        %302 = vdwg.mxu0
        %v303 = vsel %vm226, %v300, -inf
        %304 = vmax.xlane.f32.xlu0 %v303
        %v305 = vpop.xlane.xlu0 %304
        %v306 = vsub.f32 %v300, %v305
        %v307 = vmul.f32 %v306, 1.442695
        %v308 = vpow.pop %v307
        %v309 = vsel %vm226, %v308, 0.0
        %310 = vadd.xlane.f32.xlu0 %v309
        %v311 = vpop.xlane.xlu0 %310
        %v312 = vrcp.pop %v311
        %v313 = vmul.f32 %v308, %v312
        %v314 = vpack.c.bf16 %v313, %v313
        %315 = vrot.lane.b32.xlu0 %v222, 56
        %v316 = vpop.permute.xlu0 %315
        %v318 = vsel %vm226, %v314, 0
        %v321 = vsel %vm263, %v316, 0
        %323 = vmatpush.bf16.msra.mxu0 0
        %324 = vmatpush.bf16.msra.mxu0 0
        %325 = vmatpush.bf16.msra.mxu0 0
        %326 = vmatpush.bf16.msra.mxu0 0
        %327 = vmatpush.bf16.msra.mxu0 0
        %328 = vmatpush.bf16.msra.mxu0 0
        %329 = vmatpush.bf16.msra.mxu0 0
        %330 = vmatpush.bf16.msra.mxu0 %v321
        %331 = vmatmul.bf16.gmra.mxu0 %v318
        %v332 = vpop.f32.mrf.mxu0
        %v333 = vadd.f32 0.0, %v332
        %v334 = vpop.f32.mrf.mxu0
        %335 = vdwg.mxu0
        %336 = vrot.lane.b32.xlu0 %v222, 112
        %v337 = vpop.permute.xlu0 %336
        %338 = vrot.lane.b32.xlu0 %v222, 80
        %v339 = vpop.permute.xlu0 %338
        %v341 = vsel %vm226, %v337, 0
        %v344 = vsel %vm226, %v339, 0
        %346 = vmatpush.bf16.xpose.msra.mxu0 0
        %347 = vmatpush.bf16.xpose.msra.mxu0 0
        %348 = vmatpush.bf16.xpose.msra.mxu0 0
        %349 = vmatpush.bf16.xpose.msra.mxu0 0
        %350 = vmatpush.bf16.xpose.msra.mxu0 0
        %351 = vmatpush.bf16.xpose.msra.mxu0 0
        %352 = vmatpush.bf16.xpose.msra.mxu0 0
        %353 = vmatpush.bf16.xpose.msra.mxu0 %v344
        %354 = vmatmul.bf16.gmra.mxu0 %v341
        %v355 = vpop.f32.mrf.mxu0
        %v356 = vadd.f32 %v221, %v355
        %v357 = vpop.f32.mrf.mxu0
        %358 = vdwg.mxu0
        %v359 = vsel %vm226, %v356, -inf
        %360 = vmax.xlane.f32.xlu0 %v359
        %v361 = vpop.xlane.xlu0 %360
        %v362 = vsub.f32 %v356, %v361
        %v363 = vmul.f32 %v362, 1.442695
        %v364 = vpow.pop %v363
        %v365 = vsel %vm226, %v364, 0.0
        %366 = vadd.xlane.f32.xlu0 %v365
        %v367 = vpop.xlane.xlu0 %366
        %v368 = vrcp.pop %v367
        %v369 = vmul.f32 %v364, %v368
        %v370 = vpack.c.bf16 %v369, %v369
        %371 = vrot.lane.b32.xlu0 %v222, 48
        %v372 = vpop.permute.xlu0 %371
        %v374 = vsel %vm226, %v370, 0
        %v377 = vsel %vm263, %v372, 0
        %379 = vmatpush.bf16.msra.mxu0 0
        %380 = vmatpush.bf16.msra.mxu0 0
        %381 = vmatpush.bf16.msra.mxu0 0
        %382 = vmatpush.bf16.msra.mxu0 0
        %383 = vmatpush.bf16.msra.mxu0 0
        %384 = vmatpush.bf16.msra.mxu0 0
        %385 = vmatpush.bf16.msra.mxu0 0
        %386 = vmatpush.bf16.msra.mxu0 %v377
        %387 = vmatmul.bf16.gmra.mxu0 %v374
        %v388 = vpop.f32.mrf.mxu0
        %v389 = vadd.f32 0.0, %v388
        %v390 = vpop.f32.mrf.mxu0
        %391 = vdwg.mxu0
        %392 = vrot.lane.b32.xlu0 %v222, 104
        %v393 = vpop.permute.xlu0 %392
        %394 = vrot.lane.b32.xlu0 %v222, 72
        %v395 = vpop.permute.xlu0 %394
        %v397 = vsel %vm226, %v393, 0
        %v400 = vsel %vm226, %v395, 0
        %402 = vmatpush.bf16.xpose.msra.mxu0 0
        %403 = vmatpush.bf16.xpose.msra.mxu0 0
        %404 = vmatpush.bf16.xpose.msra.mxu0 0
        %405 = vmatpush.bf16.xpose.msra.mxu0 0
        %406 = vmatpush.bf16.xpose.msra.mxu0 0
        %407 = vmatpush.bf16.xpose.msra.mxu0 0
        %408 = vmatpush.bf16.xpose.msra.mxu0 0
        %409 = vmatpush.bf16.xpose.msra.mxu0 %v400
        %410 = vmatmul.bf16.gmra.mxu0 %v397
        %v411 = vpop.f32.mrf.mxu0
        %v412 = vadd.f32 %v221, %v411
        %v413 = vpop.f32.mrf.mxu0
        %414 = vdwg.mxu0
        %v415 = vsel %vm226, %v412, -inf
        %416 = vmax.xlane.f32.xlu0 %v415
        %v417 = vpop.xlane.xlu0 %416
        %v418 = vsub.f32 %v412, %v417
        %v419 = vmul.f32 %v418, 1.442695
        %v420 = vpow.pop %v419
        %v421 = vsel %vm226, %v420, 0.0
        %422 = vadd.xlane.f32.xlu0 %v421
        %v423 = vpop.xlane.xlu0 %422
        %v424 = vrcp.pop %v423
        %v425 = vmul.f32 %v420, %v424
        %v426 = vpack.c.bf16 %v425, %v425
        %427 = vrot.lane.b32.xlu0 %v222, 40
        %v428 = vpop.permute.xlu0 %427
        %v430 = vsel %vm226, %v426, 0
        %v433 = vsel %vm263, %v428, 0
        %435 = vmatpush.bf16.msra.mxu0 0
        %436 = vmatpush.bf16.msra.mxu0 0
        %437 = vmatpush.bf16.msra.mxu0 0
        %438 = vmatpush.bf16.msra.mxu0 0
        %439 = vmatpush.bf16.msra.mxu0 0
        %440 = vmatpush.bf16.msra.mxu0 0
        %441 = vmatpush.bf16.msra.mxu0 0
        %442 = vmatpush.bf16.msra.mxu0 %v433
        %443 = vmatmul.bf16.gmra.mxu0 %v430
        %v444 = vpop.f32.mrf.mxu0
        %v445 = vadd.f32 0.0, %v444
        %v446 = vpop.f32.mrf.mxu0
        %447 = vdwg.mxu0
        %449 = vrot.lane.b32.xlu0 %v333, 8
        %v450 = vpop.permute.xlu0 %449
        %453 = vrot.lane.b32.xlu0 %v389, 16
        %v454 = vpop.permute.xlu0 %453
        %457 = vrot.lane.b32.xlu0 %v445, 24
        %v458 = vpop.permute.xlu0 %457
        %v460 = vsel %vm226, %v277, %v450
        %vm461 = vcmask 130048
        %v462 = vsel %vm461, %v460, %v454
        %vm463 = vcmask 195584
        %v464 = vsel %vm463, %v462, %v458
        %v465 = vld [vmem:[%s2] sm:$0xff]
        %v466 = vld [vmem:[%s2 + $0x8] sm:$0xff]
        %v467 = vld [vmem:[%s2 + $0x10] sm:$0xff]
        %v468 = vld [vmem:[%s2 + $0x18] sm:$0xff]
        %v469 = vpack.c.bf16 %v466, %v465
        %v470 = vpack.c.bf16 %v468, %v467
        %v471 = vld [vmem:[%s2 + $0x20] sm:$0x1]
        %v472 = vpack.c.bf16 %v464, %v464
        %v473 = vperm.slane %v471, 0
        %v475 = vsel %vm204, %v472, 0
        %477 = vmatpush.bf16.msra.mxu0 0
        %478 = vmatpush.bf16.msra.mxu0 0
        %479 = vmatpush.bf16.msra.mxu0 0
        %480 = vmatpush.bf16.msra.mxu0 0
        %481 = vmatpush.bf16.msra.mxu0 0
        %482 = vmatpush.bf16.msra.mxu0 0
        %483 = vmatpush.bf16.msra.mxu0 %v470
        %484 = vmatpush.bf16.msra.mxu0 %v469
        %485 = vmatmul.bf16.gmra.mxu0 %v475
        %v486 = vpop.f32.mrf.mxu0
        %v487 = vadd.f32 %v473, %v486
        %v488 = vpop.f32.mrf.mxu0
        %489 = vdwg.mxu0
        %490 = vst.msk [vmem:[%s188] sm:$0xff] %vm204, %v487
        %s491 = sand.u32 %s115, 1
        %s492 = scalar_lea.sflag [#allocation3], %s491
        %s493 = sand.u32 %s115, 1
        %s494 = smul.addr %s493, 8
        %s495 = scalar_lea.vmem [#allocation2], %s494
        // Predicated region
        $region37: #{tpu_custom_call.1} parent=35 // pred_check
          %p496 = pneg %p125
        $region38: #{tpu_custom_call.1} parent=35 // pred_check_branch
          %498 = sbr.rel (%p496) target = $region40
        $region39: #{tpu_custom_call.1} parent=35 // pred_region
          %500 = vsyncadd %s492, 0
          %s501 = smul.addr %s18, 8
          %s502 = scalar_lea.hbm %s4, %s501
          %s504 = sshll.u32 %s495, 4
          %s505 = int_to_ptr.vmem [resolvable:$true] %s504
          %s506 = sshll.u32 %s502, 4
          %s507 = int_to_ptr.hbm [resolvable:$true] %s506
          %509 = dma.vmem_to_hbm [thread:$0]  %s505, 128, %s507, %s492
        $region40: #{tpu_custom_call.1} parent=35 // pred_fallthru
          _
      $region36: #{tpu_custom_call.1} parent=5 // pred_fallthru
        _
      %p510 = scmp.le.s32.totalorder 2, %s13
      // Predicated region
      $region41: #{tpu_custom_call.1} parent=5 // pred_check
        %p511 = pneg %p510
      $region42: #{tpu_custom_call.1} parent=5 // pred_check_branch
        %513 = sbr.rel (%p511) target = $region44
      $region43: #{tpu_custom_call.1} parent=5 // pred_region
        %s514 = ssub.s32 %s13, 2
        // Predicated region
        $region45: #{tpu_custom_call.1} parent=43 // pred_check
          %p515 = pneg %p131
        $region46: #{tpu_custom_call.1} parent=43 // pred_check_branch
          %517 = sbr.rel (%p515) target = $region48
        $region47: #{tpu_custom_call.1} parent=43 // pred_region
          %s518 = sand.u32 %s116, 1
          %s519 = scalar_lea.sflag [#allocation3], %s518
          %s520 = sand.u32 %s116, 1
          %s521 = smul.addr %s520, 8
          %s522 = scalar_lea.vmem [#allocation2], %s521
          %524 = dma.done %s519, 128
        $region48: #{tpu_custom_call.1} parent=43 // pred_fallthru
          _
      $region44: #{tpu_custom_call.1} parent=5 // pred_fallthru
        _
    $region6: #{tpu_custom_call.1} parent=1 // loop_footer
      %s17 = sadd.s32 1, %s13
    $region7: #{tpu_custom_call.1} parent=1 // loop_footer_branch
      %12 = sbr.rel target = $region3
    $region8: #{tpu_custom_call.1} parent=1 // loop_exit
      _
    %525 = vsyncpa [#allocation3], 1
    %s526 = scalar_lea.sflag [#allocation3], 1
    %527 = vsyncpa %s526, 1

</llo_original>
